<compile_context>
chip_gen: v6e
topology: v6e:2x2x1
jax: 0.10.0
libtpu: 0.0.40
codegen_flags: <defaults>
</compile_context>

<pallas_src>
import jax
import jax.numpy as jnp
import numpy as np
from jax import lax
from jax.experimental import pallas as pl
from jax.experimental.pallas import tpu as pltpu

EPS = 1e-5          # PyTorch InstanceNorm2d default eps
NPHASE = 4          # (row parity, col parity) phases of the stride-2 deconv
NTAP = 4            # input taps: (r,c), (r,c+1), (r+1,c), (r+1,c+1)


def _make_kernel(W, HW, Cout):
    """Kernel closure over the static spatial sizes."""

    def kernel(x_ref, w_ref, mask_ref, out_ref):
        # x_ref:    (Cin_pad, (H+2)*W)  flat row-major x with two zero rows appended
        # w_ref:    (NTAP, NPHASE*Cout, Cin_pad)  per-tap polyphase weights
        # mask_ref: (1, HW) f32, 0.0 where flat column index hits a row boundary wrap
        # out_ref:  (NPHASE*Cout, HW)   phase-major rows, lane-dense HW columns
        m = mask_ref[...]

        # In-kernel implicit im2col: 4 shifted views of the same flat activation.
        x00 = x_ref[:, pl.ds(0, HW)]            # x[r, c]
        x01 = x_ref[:, pl.ds(1, HW)] * m        # x[r, c+1]   (masked at c == W-1)
        x10 = x_ref[:, pl.ds(W, HW)]            # x[r+1, c]   (zero pad row handles r == H-1)
        x11 = x_ref[:, pl.ds(W + 1, HW)] * m    # x[r+1, c+1] (masked at c == W-1)

        # Polyphase transposed conv as 4 accumulated matmuls -> (NPHASE*Cout, HW).
        y = jnp.dot(w_ref[0], x00, preferred_element_type=jnp.float32)
        y = y + jnp.dot(w_ref[1], x01, preferred_element_type=jnp.float32)
        y = y + jnp.dot(w_ref[2], x10, preferred_element_type=jnp.float32)
        y = y + jnp.dot(w_ref[3], x11, preferred_element_type=jnp.float32)

        # InstanceNorm over the full 2Hx2W plane == over all 4 phases jointly, per channel.
        inv_count = 1.0 / (NPHASE * HW)
        s = jnp.sum(y, axis=1, keepdims=True)                      # (NPHASE*Cout, 1)
        mean_c = (s[0:Cout] + s[Cout:2 * Cout]
                  + s[2 * Cout:3 * Cout] + s[3 * Cout:4 * Cout]) * inv_count   # (Cout, 1)

        # Two-pass (centered) variance for numerical stability.
        devs = [y[p * Cout:(p + 1) * Cout, :] - mean_c for p in range(NPHASE)]
        ssq = devs[0] * devs[0]
        ssq = jnp.sum(ssq, axis=1, keepdims=True)
        for p in range(1, NPHASE):
            ssq = ssq + jnp.sum(devs[p] * devs[p], axis=1, keepdims=True)
        rstd = lax.rsqrt(ssq * inv_count + EPS)                    # (Cout, 1)

        # Normalize + ReLU, phase block by phase block (sublane-aligned slices of out_ref).
        for p in range(NPHASE):
            out_ref[p * Cout:(p + 1) * Cout, :] = jnp.maximum(
                devs[p] * rstd, 0.0).astype(out_ref.dtype)

    return kernel


def deconv_block_forward(x, weight, bias):
    """x: (N, Cin, H, W); weight: (Cin, Cout, 3, 3); bias: (Cout,) -> (N, Cout, 2H, 2W).

    `bias` is accepted for API parity but intentionally unused: a per-channel constant is
    cancelled exactly by InstanceNorm2d(affine=False)'s mean subtraction.
    """
    del bias
    N, Cin, H, W = x.shape
    Cout = weight.shape[1]
    HW = H * W
    Cin_pad = ((Cin + 7) // 8) * 8          # pad channels to a full sublane tile
    Lflat = (H + 2) * W                     # two zero rows appended (bottom boundary + tap slack)

    # Flat, row-padded activation (tiny JAX-side prep; no expanded im2col tensor in HBM).
    x_p = jnp.zeros((N, Cin_pad, H + 2, W), jnp.float32)
    x_p = x_p.at[:, :Cin, :H, :].set(x.astype(jnp.float32))
    x_flat = x_p.reshape(N, Cin_pad, Lflat)

    # Polyphase weights. ConvTranspose2d: out[2r-1+kh, 2c-1+kw] += x[r, c] * W[ci, co, kh, kw].
    #   phase (even,even): tap (r,c)     <- W[1,1]
    #   phase (even,odd):  tap (r,c)     <- W[1,2],  tap (r,c+1)   <- W[1,0]
    #   phase (odd, even): tap (r,c)     <- W[2,1],  tap (r+1,c)   <- W[0,1]
    #   phase (odd, odd):  tap (r,c)<-W[2,2], (r,c+1)<-W[2,0], (r+1,c)<-W[0,2], (r+1,c+1)<-W[0,0]
    wt = jnp.transpose(weight.astype(jnp.float32), (2, 3, 1, 0))        # (3, 3, Cout, Cin)
    wt = jnp.pad(wt, ((0, 0), (0, 0), (0, 0), (0, Cin_pad - Cin)))      # (3, 3, Cout, Cin_pad)
    Z = jnp.zeros((Cout, Cin_pad), jnp.float32)
    blk = lambda kh, kw: wt[kh, kw]
    w_tap = jnp.stack(
        [
            jnp.concatenate([blk(1, 1), blk(1, 2), blk(2, 1), blk(2, 2)], axis=0),  # tap (r,c)
            jnp.concatenate([Z,         blk(1, 0), Z,         blk(2, 0)], axis=0),  # tap (r,c+1)
            jnp.concatenate([Z,         Z,         blk(0, 1), blk(0, 2)], axis=0),  # tap (r+1,c)
            jnp.concatenate([Z,         Z,         Z,         blk(0, 0)], axis=0),  # tap (r+1,c+1)
        ],
        axis=0,
    )  # (NTAP, NPHASE*Cout, Cin_pad)

    # Column mask: zero the positions where a +1 column shift wraps into the next row.
    col_mask = (jnp.arange(HW, dtype=jnp.int32) % W != (W - 1)).astype(jnp.float32)
    col_mask = col_mask.reshape(1, HW)

    kernel = _make_kernel(W, HW, Cout)
    y = pl.pallas_call(
        kernel,
        out_shape=jax.ShapeDtypeStruct((N, NPHASE * Cout, HW), jnp.float32),
        grid_spec=pltpu.PrefetchScalarGridSpec(
            num_scalar_prefetch=0,
            grid=(N,),
            in_specs=[
                pl.BlockSpec((None, Cin_pad, Lflat), lambda n: (n, 0, 0)),
                pl.BlockSpec((NTAP, NPHASE * Cout, Cin_pad), lambda n: (0, 0, 0)),
                pl.BlockSpec((1, HW), lambda n: (0, 0)),
            ],
            out_specs=pl.BlockSpec((None, NPHASE * Cout, HW), lambda n: (n, 0, 0)),
        ),
        compiler_params=pltpu.CompilerParams(dimension_semantics=("parallel",)),
    )(x_flat, w_tap, col_mask)

    # Pixel-shuffle the 4 phases back into NCHW: rows are [rp, cp, Cout] major->minor.
    y = y.reshape(N, 2, 2, Cout, H, W)                       # (n, rp, cp, co, r, c)
    out = jnp.transpose(y, (0, 3, 4, 1, 5, 2))               # (n, co, r, rp, c, cp)
    return out.reshape(N, Cout, 2 * H, 2 * W)


def deconv_block_reference(x, weight, bias):
    """Pure-JAX reference of the PyTorch forward (for verification)."""
    w_oihw = jnp.transpose(weight[:, :, ::-1, ::-1], (1, 0, 2, 3))  # (Cout, Cin, 3, 3)
    y = lax.conv_general_dilated(
        x, w_oihw, window_strides=(1, 1),
        padding=((1, 2), (1, 2)), lhs_dilation=(2, 2),
        dimension_numbers=("NCHW", "OIHW", "NCHW"))
    y = y + bias[None, :, None, None]
    mean = jnp.mean(y, axis=(2, 3), keepdims=True)
    var = jnp.mean((y - mean) ** 2, axis=(2, 3), keepdims=True)
    y = (y - mean) * lax.rsqrt(var + EPS)
    return jnp.maximum(y, 0.0)


if __name__ == "__main__":
    # Small deterministic setup: N=2, Cin=4, H=W=16, Cout=8
    N, Cin, H, W, Cout = 2, 4, 16, 16, 8
    key = jax.random.PRNGKey(0)
    kx, kw, kb = jax.random.split(key, 3)

    x = jax.random.normal(kx, (N, Cin, H, W), dtype=jnp.float32)
    fan_in = Cin * 3 * 3
    bound = 1.0 / np.sqrt(fan_in)
    weight = jax.random.uniform(kw, (Cin, Cout, 3, 3), jnp.float32, -bound, bound)
    bias = jax.random.uniform(kb, (Cout,), jnp.float32, -bound, bound)

    out = jax.block_until_ready(deconv_block_forward(x, weight, bias))
    ref = jax.block_until_ready(deconv_block_reference(x, weight, bias))

    assert out.shape == (N, Cout, 2 * H, 2 * W), out.shape
    max_err = float(jnp.max(jnp.abs(out - ref)))
    assert max_err < 1e-4, f"max abs error {max_err}"
    print("KERNEL_OK")
</pallas_src>

<mosaic_0001>
module attributes {stable_mosaic.version = 11 : i64} {
  func.func @kernel(%arg0: i32, %arg1: memref<1x8x288xf32, #tpu.memory_space<vmem>>, %arg2: memref<4x32x8xf32, #tpu.memory_space<vmem>>, %arg3: memref<1x256xf32, #tpu.memory_space<vmem>>, %arg4: memref<1x32x256xf32, #tpu.memory_space<vmem>>) attributes {dimension_semantics = [#tpu.dimension_semantics<parallel>], iteration_bounds = array<i64: 2>, scalar_prefetch = 0 : i64, scratch_operands = 0 : i64, tpu.core_type = #tpu.core_type<tc>, window_params = [{transform_indices = @transform_0, window_bounds = array<i64: 1, 8, 288>}, {pipeline_mode = #tpu.pipeline_mode<synchronous>, transform_indices = @transform_1, window_bounds = array<i64: 4, 32, 8>}, {pipeline_mode = #tpu.pipeline_mode<synchronous>, transform_indices = @transform_2, window_bounds = array<i64: 1, 256>}, {transform_indices = @transform_3, window_bounds = array<i64: 1, 32, 256>}]} {
    %c0 = arith.constant 0 : index
    %c0_0 = arith.constant 0 : index
    %0 = vector.load %arg3[%c0, %c0_0] : memref<1x256xf32, #tpu.memory_space<vmem>>, vector<1x256xf32>
    %c0_1 = arith.constant 0 : index
    %c0_2 = arith.constant 0 : index
    %c0_3 = arith.constant 0 : index
    %1 = vector.load %arg1[%c0_1, %c0_2, %c0_3] : memref<1x8x288xf32, #tpu.memory_space<vmem>>, vector<1x8x256xf32>
    %2 = vector.shape_cast %1 : vector<1x8x256xf32> to vector<8x256xf32>
    %c0_4 = arith.constant 0 : index
    %c0_5 = arith.constant 0 : index
    %c1 = arith.constant 1 : index
    %3 = vector.load %arg1[%c0_4, %c0_5, %c1] : memref<1x8x288xf32, #tpu.memory_space<vmem>>, vector<1x8x256xf32>
    %4 = vector.shape_cast %3 : vector<1x8x256xf32> to vector<8x256xf32>
    %5 = vector.broadcast %0 : vector<1x256xf32> to vector<8x256xf32>
    %6 = arith.mulf %4, %5 : vector<8x256xf32>
    %c0_6 = arith.constant 0 : index
    %c0_7 = arith.constant 0 : index
    %c16 = arith.constant 16 : index
    %7 = vector.load %arg1[%c0_6, %c0_7, %c16] : memref<1x8x288xf32, #tpu.memory_space<vmem>>, vector<1x8x256xf32>
    %8 = vector.shape_cast %7 : vector<1x8x256xf32> to vector<8x256xf32>
    %c0_8 = arith.constant 0 : index
    %c0_9 = arith.constant 0 : index
    %c17 = arith.constant 17 : index
    %9 = vector.load %arg1[%c0_8, %c0_9, %c17] : memref<1x8x288xf32, #tpu.memory_space<vmem>>, vector<1x8x256xf32>
    %10 = vector.shape_cast %9 : vector<1x8x256xf32> to vector<8x256xf32>
    %11 = vector.broadcast %0 : vector<1x256xf32> to vector<8x256xf32>
    %12 = arith.mulf %10, %11 : vector<8x256xf32>
    %c0_10 = arith.constant 0 : index
    %c0_11 = arith.constant 0 : index
    %c0_12 = arith.constant 0 : index
    %13 = vector.load %arg2[%c0_10, %c0_11, %c0_12] : memref<4x32x8xf32, #tpu.memory_space<vmem>>, vector<1x32x8xf32>
    %14 = vector.shape_cast %13 : vector<1x32x8xf32> to vector<32x8xf32>
    %cst = arith.constant dense<0.000000e+00> : vector<32x256xf32>
    %15 = tpu.matmul %14, %2, %cst {dimension_numbers = #tpu.dot_dimension_numbers<[1], [0], [0], [1], [0, 0, 1, 1], [], []>} : vector<32x8xf32>, vector<8x256xf32>, vector<32x256xf32> -> vector<32x256xf32>
    %c1_13 = arith.constant 1 : index
    %c0_14 = arith.constant 0 : index
    %c0_15 = arith.constant 0 : index
    %16 = vector.load %arg2[%c1_13, %c0_14, %c0_15] : memref<4x32x8xf32, #tpu.memory_space<vmem>>, vector<1x32x8xf32>
    %17 = vector.shape_cast %16 : vector<1x32x8xf32> to vector<32x8xf32>
    %cst_16 = arith.constant dense<0.000000e+00> : vector<32x256xf32>
    %18 = tpu.matmul %17, %6, %cst_16 {dimension_numbers = #tpu.dot_dimension_numbers<[1], [0], [0], [1], [0, 0, 1, 1], [], []>} : vector<32x8xf32>, vector<8x256xf32>, vector<32x256xf32> -> vector<32x256xf32>
    %19 = arith.addf %15, %18 : vector<32x256xf32>
    %c2 = arith.constant 2 : index
    %c0_17 = arith.constant 0 : index
    %c0_18 = arith.constant 0 : index
    %20 = vector.load %arg2[%c2, %c0_17, %c0_18] : memref<4x32x8xf32, #tpu.memory_space<vmem>>, vector<1x32x8xf32>
    %21 = vector.shape_cast %20 : vector<1x32x8xf32> to vector<32x8xf32>
    %cst_19 = arith.constant dense<0.000000e+00> : vector<32x256xf32>
    %22 = tpu.matmul %21, %8, %cst_19 {dimension_numbers = #tpu.dot_dimension_numbers<[1], [0], [0], [1], [0, 0, 1, 1], [], []>} : vector<32x8xf32>, vector<8x256xf32>, vector<32x256xf32> -> vector<32x256xf32>
    %23 = arith.addf %19, %22 : vector<32x256xf32>
    %c3 = arith.constant 3 : index
    %c0_20 = arith.constant 0 : index
    %c0_21 = arith.constant 0 : index
    %24 = vector.load %arg2[%c3, %c0_20, %c0_21] : memref<4x32x8xf32, #tpu.memory_space<vmem>>, vector<1x32x8xf32>
    %25 = vector.shape_cast %24 : vector<1x32x8xf32> to vector<32x8xf32>
    %cst_22 = arith.constant dense<0.000000e+00> : vector<32x256xf32>
    %26 = tpu.matmul %25, %12, %cst_22 {dimension_numbers = #tpu.dot_dimension_numbers<[1], [0], [0], [1], [0, 0, 1, 1], [], []>} : vector<32x8xf32>, vector<8x256xf32>, vector<32x256xf32> -> vector<32x256xf32>
    %27 = arith.addf %23, %26 : vector<32x256xf32>
    %cst_23 = arith.constant dense<0.000000e+00> : vector<32xf32>
    %28 = vector.multi_reduction <add>, %27, %cst_23 [1] : vector<32x256xf32> to vector<32xf32>
    %29 = vector.shape_cast %28 : vector<32xf32> to vector<32x1xf32>
    %30 = vector.extract_strided_slice %29 {offsets = [0, 0], sizes = [8, 1], strides = [1, 1]} : vector<32x1xf32> to vector<8x1xf32>
    %31 = vector.extract_strided_slice %29 {offsets = [8, 0], sizes = [8, 1], strides = [1, 1]} : vector<32x1xf32> to vector<8x1xf32>
    %32 = arith.addf %30, %31 : vector<8x1xf32>
    %33 = vector.extract_strided_slice %29 {offsets = [16, 0], sizes = [8, 1], strides = [1, 1]} : vector<32x1xf32> to vector<8x1xf32>
    %34 = arith.addf %32, %33 : vector<8x1xf32>
    %35 = vector.extract_strided_slice %29 {offsets = [24, 0], sizes = [8, 1], strides = [1, 1]} : vector<32x1xf32> to vector<8x1xf32>
    %36 = arith.addf %34, %35 : vector<8x1xf32>
    %cst_24 = arith.constant 9.765625E-4 : f32
    %37 = vector.broadcast %cst_24 : f32 to vector<8x1xf32>
    %38 = arith.mulf %36, %37 : vector<8x1xf32>
    %39 = vector.extract_strided_slice %27 {offsets = [0, 0], sizes = [8, 256], strides = [1, 1]} : vector<32x256xf32> to vector<8x256xf32>
    %40 = vector.broadcast %38 : vector<8x1xf32> to vector<8x256xf32>
    %41 = arith.subf %39, %40 : vector<8x256xf32>
    %42 = vector.extract_strided_slice %27 {offsets = [8, 0], sizes = [8, 256], strides = [1, 1]} : vector<32x256xf32> to vector<8x256xf32>
    %43 = vector.broadcast %38 : vector<8x1xf32> to vector<8x256xf32>
    %44 = arith.subf %42, %43 : vector<8x256xf32>
    %45 = vector.extract_strided_slice %27 {offsets = [16, 0], sizes = [8, 256], strides = [1, 1]} : vector<32x256xf32> to vector<8x256xf32>
    %46 = vector.broadcast %38 : vector<8x1xf32> to vector<8x256xf32>
    %47 = arith.subf %45, %46 : vector<8x256xf32>
    %48 = vector.extract_strided_slice %27 {offsets = [24, 0], sizes = [8, 256], strides = [1, 1]} : vector<32x256xf32> to vector<8x256xf32>
    %49 = vector.broadcast %38 : vector<8x1xf32> to vector<8x256xf32>
    %50 = arith.subf %48, %49 : vector<8x256xf32>
    %51 = arith.mulf %41, %41 : vector<8x256xf32>
    %cst_25 = arith.constant dense<0.000000e+00> : vector<8xf32>
    %52 = vector.multi_reduction <add>, %51, %cst_25 [1] : vector<8x256xf32> to vector<8xf32>
    %53 = vector.shape_cast %52 : vector<8xf32> to vector<8x1xf32>
    %54 = arith.mulf %44, %44 : vector<8x256xf32>
    %cst_26 = arith.constant dense<0.000000e+00> : vector<8xf32>
    %55 = vector.multi_reduction <add>, %54, %cst_26 [1] : vector<8x256xf32> to vector<8xf32>
    %56 = vector.shape_cast %55 : vector<8xf32> to vector<8x1xf32>
    %57 = arith.addf %53, %56 : vector<8x1xf32>
    %58 = arith.mulf %47, %47 : vector<8x256xf32>
    %cst_27 = arith.constant dense<0.000000e+00> : vector<8xf32>
    %59 = vector.multi_reduction <add>, %58, %cst_27 [1] : vector<8x256xf32> to vector<8xf32>
    %60 = vector.shape_cast %59 : vector<8xf32> to vector<8x1xf32>
    %61 = arith.addf %57, %60 : vector<8x1xf32>
    %62 = arith.mulf %50, %50 : vector<8x256xf32>
    %cst_28 = arith.constant dense<0.000000e+00> : vector<8xf32>
    %63 = vector.multi_reduction <add>, %62, %cst_28 [1] : vector<8x256xf32> to vector<8xf32>
    %64 = vector.shape_cast %63 : vector<8xf32> to vector<8x1xf32>
    %65 = arith.addf %61, %64 : vector<8x1xf32>
    %cst_29 = arith.constant 9.765625E-4 : f32
    %66 = vector.broadcast %cst_29 : f32 to vector<8x1xf32>
    %67 = arith.mulf %65, %66 : vector<8x1xf32>
    %cst_30 = arith.constant 9.99999974E-6 : f32
    %68 = vector.broadcast %cst_30 : f32 to vector<8x1xf32>
    %69 = arith.addf %67, %68 : vector<8x1xf32>
    %70 = math.rsqrt %69 : vector<8x1xf32>
    %71 = vector.broadcast %70 : vector<8x1xf32> to vector<8x256xf32>
    %72 = arith.mulf %41, %71 : vector<8x256xf32>
    %cst_31 = arith.constant 0.000000e+00 : f32
    %73 = vector.broadcast %cst_31 : f32 to vector<8x256xf32>
    %74 = arith.maximumf %72, %73 : vector<8x256xf32>
    %c0_32 = arith.constant 0 : index
    %c0_33 = arith.constant 0 : index
    %c0_34 = arith.constant 0 : index
    %75 = vector.load %arg4[%c0_32, %c0_33, %c0_34] : memref<1x32x256xf32, #tpu.memory_space<vmem>>, vector<1x8x256xf32>
    %76 = vector.shape_cast %75 : vector<1x8x256xf32> to vector<8x256xf32>
    %77 = vector.shape_cast %74 : vector<8x256xf32> to vector<1x8x256xf32>
    tpu.vector_store %arg4[%c0_32, %c0_33, %c0_34], %77 {strides = array<i32>} : memref<1x32x256xf32, #tpu.memory_space<vmem>>, vector<1x8x256xf32>,
    %78 = vector.broadcast %70 : vector<8x1xf32> to vector<8x256xf32>
    %79 = arith.mulf %44, %78 : vector<8x256xf32>
    %cst_35 = arith.constant 0.000000e+00 : f32
    %80 = vector.broadcast %cst_35 : f32 to vector<8x256xf32>
    %81 = arith.maximumf %79, %80 : vector<8x256xf32>
    %c0_36 = arith.constant 0 : index
    %c8 = arith.constant 8 : index
    %c0_37 = arith.constant 0 : index
    %82 = vector.load %arg4[%c0_36, %c8, %c0_37] : memref<1x32x256xf32, #tpu.memory_space<vmem>>, vector<1x8x256xf32>
    %83 = vector.shape_cast %82 : vector<1x8x256xf32> to vector<8x256xf32>
    %84 = vector.shape_cast %81 : vector<8x256xf32> to vector<1x8x256xf32>
    tpu.vector_store %arg4[%c0_36, %c8, %c0_37], %84 {strides = array<i32>} : memref<1x32x256xf32, #tpu.memory_space<vmem>>, vector<1x8x256xf32>,
    %85 = vector.broadcast %70 : vector<8x1xf32> to vector<8x256xf32>
    %86 = arith.mulf %47, %85 : vector<8x256xf32>
    %cst_38 = arith.constant 0.000000e+00 : f32
    %87 = vector.broadcast %cst_38 : f32 to vector<8x256xf32>
    %88 = arith.maximumf %86, %87 : vector<8x256xf32>
    %c0_39 = arith.constant 0 : index
    %c16_40 = arith.constant 16 : index
    %c0_41 = arith.constant 0 : index
    %89 = vector.load %arg4[%c0_39, %c16_40, %c0_41] : memref<1x32x256xf32, #tpu.memory_space<vmem>>, vector<1x8x256xf32>
    %90 = vector.shape_cast %89 : vector<1x8x256xf32> to vector<8x256xf32>
    %91 = vector.shape_cast %88 : vector<8x256xf32> to vector<1x8x256xf32>
    tpu.vector_store %arg4[%c0_39, %c16_40, %c0_41], %91 {strides = array<i32>} : memref<1x32x256xf32, #tpu.memory_space<vmem>>, vector<1x8x256xf32>,
    %92 = vector.broadcast %70 : vector<8x1xf32> to vector<8x256xf32>
    %93 = arith.mulf %50, %92 : vector<8x256xf32>
    %cst_42 = arith.constant 0.000000e+00 : f32
    %94 = vector.broadcast %cst_42 : f32 to vector<8x256xf32>
    %95 = arith.maximumf %93, %94 : vector<8x256xf32>
    %c0_43 = arith.constant 0 : index
    %c24 = arith.constant 24 : index
    %c0_44 = arith.constant 0 : index
    %96 = vector.load %arg4[%c0_43, %c24, %c0_44] : memref<1x32x256xf32, #tpu.memory_space<vmem>>, vector<1x8x256xf32>
    %97 = vector.shape_cast %96 : vector<1x8x256xf32> to vector<8x256xf32>
    %98 = vector.shape_cast %95 : vector<8x256xf32> to vector<1x8x256xf32>
    tpu.vector_store %arg4[%c0_43, %c24, %c0_44], %98 {strides = array<i32>} : memref<1x32x256xf32, #tpu.memory_space<vmem>>, vector<1x8x256xf32>,
    return
  }
  func.func @transform_0(%arg0: i32) -> (i32, i32, i32) {
    %c0_i32 = arith.constant 0 : i32
    %c0_i32_0 = arith.constant 0 : i32
    %c0_i32_1 = arith.constant 0 : i32
    return %arg0, %c0_i32, %c0_i32_0 : i32, i32, i32
  }
  func.func @transform_1(%arg0: i32) -> (i32, i32, i32) {
    %c0_i32 = arith.constant 0 : i32
    %c0_i32_0 = arith.constant 0 : i32
    %c0_i32_1 = arith.constant 0 : i32
    %c0_i32_2 = arith.constant 0 : i32
    return %c0_i32, %c0_i32_0, %c0_i32_1 : i32, i32, i32
  }
  func.func @transform_2(%arg0: i32) -> (i32, i32) {
    %c0_i32 = arith.constant 0 : i32
    %c0_i32_0 = arith.constant 0 : i32
    %c0_i32_1 = arith.constant 0 : i32
    return %c0_i32, %c0_i32_0 : i32, i32
  }
  func.func @transform_3(%arg0: i32) -> (i32, i32, i32) {
    %c0_i32 = arith.constant 0 : i32
    %c0_i32_0 = arith.constant 0 : i32
    %c0_i32_1 = arith.constant 0 : i32
    return %arg0, %c0_i32, %c0_i32_0 : i32, i32, i32
  }
}

</mosaic_0001>

<llo_original>
// kernel: tpu_custom_call.1
$region0: #{tpu_custom_call.1}
  #allocation0 [shape = 'u32[]', space=smem, size = 0x4, offset = 0x4, fixed_abs, tag = 'smem constant byte address 0x4 - core index']
  #allocation1 [shape = 'u32[144,128]{1,0:T(1,128)}', space=vmem, size = 0x12000, scoped, tag = 'internal scratch']
  %s0 = inlined_call_operand.vmem [shape: f32[2,8,288], index: 0, kind: input, shape index: {}]
  %s1 = inlined_call_operand.vmem [shape: f32[4,32,8], index: 1, kind: input, shape index: {}]
  %s2 = inlined_call_operand.vmem [shape: f32[1,256], index: 2, kind: input, shape index: {}]
  %s3 = inlined_call_operand.hbm [shape: f32[2,32,256], index: 3, kind: output, shape index: {}]
  %s4 = sld [smem:[#allocation0]]
  $region45: #{tpu_custom_call.1} parent=0
    _
  %s6 = ssub.s32 1, %s4
  %s7 = scalar_select 0, %s6, %s4
  $region1: #{tpu_custom_call.1} parent=0
    #allocation2 [shape = 'u8[65536]{0}', space=vmem, size = 0x10000, scoped, tag = 'output window, operand 0']
    #allocation3 [shape = 's32[2]{0}', space=sflag, size = 0x8, scoped, tag = 'scoped memory for tpu_custom_call.1']
    %8 = vsyncpa [#allocation3], 0
    %s9 = scalar_lea.sflag [#allocation3], 1
    %10 = vsyncpa %s9, 0
    loop: start=0, step=1, limit=4
    $region2: #{tpu_custom_call.1} parent=1 // loop_pre_header
      _
    $region3: #{tpu_custom_call.1} parent=1 // loop_header
      %s12 = sphi 0, %s16
      %p13 = scmp.ge.s32.totalorder %s12, 4
      %s22 = sphi 0, %s24
      %s25 = sphi 0, %s22
      %s26 = sphi 0, %s25
      %s42 = sphi 0, %s26
      %s46 = sphi 0, %s46
      %s48 = sphi 0, %s46
      %s49 = sphi 0, %s48
      %s63 = sphi 0, %s49
      %s67 = sphi 0, %s67
      %s69 = sphi 0, %s67
      %s70 = sphi 0, %s69
      %s84 = sphi 0, %s70
      %s90 = sphi 0, %s92
      %s93 = sphi 0, %s90
      %s94 = sphi 0, %s93
      %s110 = sphi 0, %s94
    $region4: #{tpu_custom_call.1} parent=1 // loop_header_branch
      %15 = sbr.rel (%p13) target = $region8
    $region5: #{tpu_custom_call.1} parent=1 // loop_body
      %s17 = ssub.s32 %s12, 1
      %s18 = ssub.s32 %s12, 2
      %s19 = sadd.s32 %s12, 1
      %s20 = ssub.s32 %s12, %s19
      %p21 = scmp.eq.s32.totalorder %s20, 0
      %s23 = sadd.s32 %s22, 1
      %s24 = scalar_select %p21, %s22, %s23
      %p27 = pneg %p21
      %p28 = scmp.eq.s32.totalorder %s12, 1
      %p29 = por %p27, %p28
      %p30 = scmp.ne.s32.totalorder %s22, %s25
      %p31 = scmp.eq.s32.totalorder %s12, 0
      %p32 = por %p30, %p31
      %p33 = scmp.ne.s32.totalorder %s22, %s25
      %p34 = scmp.eq.s32.totalorder %s17, 1
      %p35 = por %p33, %p34
      %p36 = scmp.ne.s32.totalorder %s25, %s26
      %p37 = scmp.eq.s32.totalorder %s17, 0
      %p38 = por %p36, %p37
      %p39 = scmp.ne.s32.totalorder %s25, %s26
      %p40 = scmp.eq.s32.totalorder %s18, 1
      %p41 = por %p39, %p40
      %p43 = scmp.ne.s32.totalorder %s26, %s42
      %p44 = scmp.eq.s32.totalorder %s18, 0
      %p45 = por %p43, %p44
      %s47 = sadd.s32 %s46, 1
      %p50 = scmp.eq.s32.totalorder %s12, 1
      %p51 = scmp.ne.s32.totalorder %s46, %s48
      %p52 = scmp.eq.s32.totalorder %s12, 0
      %p53 = por %p51, %p52
      %p54 = scmp.ne.s32.totalorder %s46, %s48
      %p55 = scmp.eq.s32.totalorder %s17, 1
      %p56 = por %p54, %p55
      %p57 = scmp.ne.s32.totalorder %s48, %s49
      %p58 = scmp.eq.s32.totalorder %s17, 0
      %p59 = por %p57, %p58
      %p60 = scmp.ne.s32.totalorder %s48, %s49
      %p61 = scmp.eq.s32.totalorder %s18, 1
      %p62 = por %p60, %p61
      %p64 = scmp.ne.s32.totalorder %s49, %s63
      %p65 = scmp.eq.s32.totalorder %s18, 0
      %p66 = por %p64, %p65
      %s68 = sadd.s32 %s67, 1
      %p71 = scmp.eq.s32.totalorder %s12, 1
      %p72 = scmp.ne.s32.totalorder %s67, %s69
      %p73 = scmp.eq.s32.totalorder %s12, 0
      %p74 = por %p72, %p73
      %p75 = scmp.ne.s32.totalorder %s67, %s69
      %p76 = scmp.eq.s32.totalorder %s17, 1
      %p77 = por %p75, %p76
      %p78 = scmp.ne.s32.totalorder %s69, %s70
      %p79 = scmp.eq.s32.totalorder %s17, 0
      %p80 = por %p78, %p79
      %p81 = scmp.ne.s32.totalorder %s69, %s70
      %p82 = scmp.eq.s32.totalorder %s18, 1
      %p83 = por %p81, %p82
      %p85 = scmp.ne.s32.totalorder %s70, %s84
      %p86 = scmp.eq.s32.totalorder %s18, 0
      %p87 = por %p85, %p86
      %s88 = ssub.s32 %s12, %s19
      %p89 = scmp.eq.s32.totalorder %s88, 0
      %s91 = sadd.s32 %s90, 1
      %s92 = scalar_select %p89, %s90, %s91
      %p95 = pneg %p89
      %p96 = scmp.eq.s32.totalorder %s12, 1
      %p97 = por %p95, %p96
      %p98 = scmp.ne.s32.totalorder %s90, %s93
      %p99 = scmp.eq.s32.totalorder %s12, 0
      %p100 = por %p98, %p99
      %p101 = scmp.ne.s32.totalorder %s90, %s93
      %p102 = scmp.eq.s32.totalorder %s17, 1
      %p103 = por %p101, %p102
      %p104 = scmp.ne.s32.totalorder %s93, %s94
      %p105 = scmp.eq.s32.totalorder %s17, 0
      %p106 = por %p104, %p105
      %p107 = scmp.ne.s32.totalorder %s93, %s94
      %p108 = scmp.eq.s32.totalorder %s18, 1
      %p109 = por %p107, %p108
      %p111 = scmp.ne.s32.totalorder %s94, %s110
      %p112 = scmp.eq.s32.totalorder %s18, 0
      %p113 = por %p111, %p112
      %p114 = scmp.le.s32.totalorder 1, %s12
      %p115 = scmp.lt.s32.totalorder %s12, 3
      %p116 = pnand %p114, %p115
      %p117 = pneg %p116
      // Predicated region
      $region9: #{tpu_custom_call.1} parent=5 // pred_check
        _
      $region10: #{tpu_custom_call.1} parent=5 // pred_check_branch
        %119 = sbr.rel (%p116) target = $region12
      $region11: #{tpu_custom_call.1} parent=5 // pred_region
        %s120 = ssub.s32 %s12, 1
        // Predicated region
        $region13: #{tpu_custom_call.1} parent=11 // pred_check
          %p121 = pneg %p59
        $region14: #{tpu_custom_call.1} parent=11 // pred_check_branch
          %123 = sbr.rel (%p121) target = $region16
        $region15: #{tpu_custom_call.1} parent=11 // pred_region
          _
        $region16: #{tpu_custom_call.1} parent=11 // pred_fallthru
          _
        // Predicated region
        $region17: #{tpu_custom_call.1} parent=11 // pred_check
          %p124 = pneg %p80
        $region18: #{tpu_custom_call.1} parent=11 // pred_check_branch
          %126 = sbr.rel (%p124) target = $region20
        $region19: #{tpu_custom_call.1} parent=11 // pred_region
          _
        $region20: #{tpu_custom_call.1} parent=11 // pred_fallthru
          _
      $region12: #{tpu_custom_call.1} parent=5 // pred_fallthru
        _
      %p127 = scmp.lt.s32.totalorder %s12, 2
      // Predicated region
      $region21: #{tpu_custom_call.1} parent=5 // pred_check
        %p128 = pneg %p127
      $region22: #{tpu_custom_call.1} parent=5 // pred_check_branch
        %130 = sbr.rel (%p128) target = $region24
      $region23: #{tpu_custom_call.1} parent=5 // pred_region
        // Predicated region
        $region25: #{tpu_custom_call.1} parent=23 // pred_check
          %p131 = pneg %p32
        $region26: #{tpu_custom_call.1} parent=23 // pred_check_branch
          %133 = sbr.rel (%p131) target = $region28
        $region27: #{tpu_custom_call.1} parent=23 // pred_region
          %p134 = scmp.lt.s32.totalorder %s12, 1
          %s135 = scalar_select %p134, %s12, 1
          %s136 = smul.addr %s135, 3
          %s137 = smul.addr %s136, 8
          %s138 = scalar_lea.vmem %s0, %s137
        $region28: #{tpu_custom_call.1} parent=23 // pred_fallthru
          _
      $region24: #{tpu_custom_call.1} parent=5 // pred_fallthru
        _
      %p139 = scmp.le.s32.totalorder 1, %s12
      %p140 = scmp.lt.s32.totalorder %s12, 3
      %p141 = pnand %p139, %p140
      %p142 = pneg %p141
      // Predicated region
      $region29: #{tpu_custom_call.1} parent=5 // pred_check
        _
      $region30: #{tpu_custom_call.1} parent=5 // pred_check_branch
        %144 = sbr.rel (%p141) target = $region32
      $region31: #{tpu_custom_call.1} parent=5 // pred_region
        %s145 = ssub.s32 %s12, 1
        %p146 = scmp.lt.s32.totalorder %s17, 1
        %s147 = scalar_select %p146, %s17, 1
        %s148 = smul.addr %s147, 3
        %s149 = smul.addr %s148, 8
        %s150 = scalar_lea.vmem %s0, %s149
        %p151 = pneg %p38
        %p152 = pneg %p35
        %p153 = pneg %p59
        %p154 = pneg %p56
        %p155 = pneg %p80
        %p156 = pneg %p77
        %p157 = pneg %p106
        %p158 = pneg %p103
        %s159 = sand.u32 %s93, 1
        %s160 = scalar_lea.sflag [#allocation3], %s159
        %s161 = sand.u32 %s93, 1
        %s162 = smul.addr %s161, 64
        %s163 = scalar_lea.vmem [#allocation2], %s162
        %p164 = scmp.lt.s32.totalorder %s17, 1
        %s165 = scalar_select %p164, %s17, 1
        %s166 = smul.addr %s165, 3
        %s167 = smul.addr %s166, 8
        %s168 = scalar_lea.vmem %s0, %s167
        %v169 = vld [vmem:[%s2] sm:$0x3]
        %v170 = vld [vmem:[%s168] sm:$0xff]
        %v171 = vld [vmem:[%s168 + $0x8] sm:$0xff]
        %v172 = vld [vmem:[%s168 + $0x10] sm:$0xff]
        %v174 = vlaneseq
        %v175 = vshrl.u32 %v174, 7
        %v176 = vsub.s32 0, %v175
        %v177 = vrot.slane %v169, %v176
        %v178 = vlaneseq
        %v179 = vshrl.u32 %v178, 7
        %v180 = vsub.s32 1, %v179
        %v181 = vrot.slane %v169, %v180
        %182 = vrot.lane.b32.xlu0 %v177, 1
        %v183 = vpop.permute.xlu0 %182
        %184 = vrot.lane.b32.xlu0 %v181, 1
        %v185 = vpop.permute.xlu0 %184
        %vm186 = vcmask 7168
        %v187 = vsel %vm186, %v183, %v185
        %v191 = vmul.f32 %v170, %v183
        %v192 = vmul.f32 %v171, %v187
        %v193 = vmul.f32 %v172, %v185
        %194 = vrot.lane.b32.xlu0 %v177, 17
        %v195 = vpop.permute.xlu0 %194
        %196 = vrot.lane.b32.xlu0 %v181, 17
        %v197 = vpop.permute.xlu0 %196
        %vm198 = vcmask 138240
        %v199 = vsel %vm198, %v195, %v197
        %v203 = vmul.f32 %v170, %v195
        %v204 = vmul.f32 %v171, %v199
        %v205 = vmul.f32 %v172, %v197
        %v206 = vld [vmem:[%s1] sm:$0xff]
        %v207 = vld [vmem:[%s1 + $0x8] sm:$0xff]
        %v208 = vld [vmem:[%s1 + $0x10] sm:$0xff]
        %v209 = vld [vmem:[%s1 + $0x18] sm:$0xff]
        %s210 = scalar_lea.vmem %s1, 32
        %v211 = vld [vmem:[%s210] sm:$0xff]
        %v212 = vld [vmem:[%s210 + $0x8] sm:$0xff]
        %v213 = vld [vmem:[%s210 + $0x10] sm:$0xff]
        %v214 = vld [vmem:[%s210 + $0x18] sm:$0xff]
        %218 = vrot.lane.b32.xlu0 %v191, 127
        %v219 = vpop.permute.xlu0 %218
        %220 = vrot.lane.b32.xlu0 %v192, 127
        %v221 = vpop.permute.xlu0 %220
        %222 = vrot.lane.b32.xlu0 %v193, 127
        %v223 = vpop.permute.xlu0 %222
        %vm224 = vcmask 1039360
        %v225 = vsel %vm224, %v219, %v221
        %v226 = vsel %vm224, %v221, %v223
        %vm229 = vcmask 64512
        %v231 = vsel %vm229, %v211, 0
        %v234 = vsel %vm229, %v212, 0
        %v237 = vsel %vm229, %v213, 0
        %v240 = vsel %vm229, %v214, 0
        %242 = vmatprep.subr.mxu0 0.0
        %243 = vmatpush1.msra.mxu0 0.0
        %244 = vmatprep.subr.mxu0 0.0
        %245 = vmatpush1.msra.mxu0 0.0
        %246 = vmatprep.subr.mxu0 0.0
        %247 = vmatpush1.msra.mxu0 0.0
        %248 = vmatprep.subr.mxu0 0.0
        %249 = vmatpush1.msra.mxu0 0.0
        %250 = vmatprep.subr.mxu0 0.0
        %251 = vmatpush1.msra.mxu0 0.0
        %252 = vmatprep.subr.mxu0 0.0
        %253 = vmatpush1.msra.mxu0 0.0
        %254 = vmatprep.subr.mxu0 0.0
        %255 = vmatpush1.msra.mxu0 0.0
        %256 = vmatprep.subr.mxu0 0.0
        %257 = vmatpush1.msra.mxu0 0.0
        %258 = vmatprep.subr.mxu0 0.0
        %259 = vmatpush1.msra.mxu0 0.0
        %260 = vmatprep.subr.mxu0 0.0
        %261 = vmatpush1.msra.mxu0 0.0
        %262 = vmatprep.subr.mxu0 0.0
        %263 = vmatpush1.msra.mxu0 0.0
        %264 = vmatprep.subr.mxu0 0.0
        %265 = vmatpush1.msra.mxu0 0.0
        %266 = vmatprep.subr.mxu0 0.0
        %267 = vmatpush1.msra.mxu0 0.0
        %268 = vmatprep.subr.mxu0 0.0
        %269 = vmatpush1.msra.mxu0 0.0
        %270 = vmatprep.subr.mxu0 0.0
        %271 = vmatpush1.msra.mxu0 0.0
        %272 = vmatprep.subr.mxu0 %v226
        %273 = vmatpush1.msra.mxu0 %v225
        %274 = vmatprep.subr.mxu0 0.0
        %275 = vmatpush2.msra.mxu0 0.0
        %276 = vmatprep.subr.mxu0 0.0
        %277 = vmatpush2.msra.mxu0 0.0
        %278 = vmatprep.subr.mxu0 0.0
        %279 = vmatpush2.msra.mxu0 0.0
        %280 = vmatprep.subr.mxu0 0.0
        %281 = vmatpush2.msra.mxu0 0.0
        %282 = vmatprep.subr.mxu0 0.0
        %283 = vmatpush2.msra.mxu0 0.0
        %284 = vmatprep.subr.mxu0 0.0
        %285 = vmatpush2.msra.mxu0 0.0
        %286 = vmatprep.subr.mxu0 0.0
        %287 = vmatpush2.msra.mxu0 0.0
        %288 = vmatprep.subr.mxu0 0.0
        %289 = vmatpush2.msra.mxu0 0.0
        %290 = vmatprep.subr.mxu0 0.0
        %291 = vmatpush2.msra.mxu0 0.0
        %292 = vmatprep.subr.mxu0 0.0
        %293 = vmatpush2.msra.mxu0 0.0
        %294 = vmatprep.subr.mxu0 0.0
        %295 = vmatpush2.msra.mxu0 0.0
        %296 = vmatprep.subr.mxu0 0.0
        %297 = vmatpush2.msra.mxu0 0.0
        %298 = vmatprep.subr.mxu0 0.0
        %299 = vmatpush2.msra.mxu0 0.0
        %300 = vmatprep.subr.mxu0 0.0
        %301 = vmatpush2.msra.mxu0 0.0
        %302 = vmatprep.subr.mxu0 0.0
        %303 = vmatpush2.msra.mxu0 0.0
        %304 = vmatprep.subr.mxu0 0.0
        %305 = vmatpush2.msra.mxu0 0.0
        %306 = vmatprep.mubr.f32.mxu0 0.0
        %307 = vmatmul.mubr.f32.gmra.mxu0 %v231
        %v308 = vpop.f32.mrf.mxu0
        %v309 = vadd.f32 0.0, %v308
        %v310 = vpop.f32.mrf.mxu0
        %v311 = vadd.f32 0.0, %v310
        %312 = vmatprep.mubr.f32.mxu0 0.0
        %313 = vmatmul.mubr.f32.gmra.mxu0 %v234
        %v314 = vpop.f32.mrf.mxu0
        %v315 = vadd.f32 0.0, %v314
        %v316 = vpop.f32.mrf.mxu0
        %v317 = vadd.f32 0.0, %v316
        %318 = vmatprep.mubr.f32.mxu0 0.0
        %319 = vmatmul.mubr.f32.gmra.mxu0 %v237
        %v320 = vpop.f32.mrf.mxu0
        %v321 = vadd.f32 0.0, %v320
        %v322 = vpop.f32.mrf.mxu0
        %v323 = vadd.f32 0.0, %v322
        %324 = vmatprep.mubr.f32.mxu0 0.0
        %325 = vmatmul.mubr.f32.gmra.mxu0 %v240
        %v326 = vpop.f32.mrf.mxu0
        %v327 = vadd.f32 0.0, %v326
        %v328 = vpop.f32.mrf.mxu0
        %v329 = vadd.f32 0.0, %v328
        %330 = vdwg.mxu0
        %v332 = vsel %vm229, %v206, 0
        %v335 = vsel %vm229, %v207, 0
        %v338 = vsel %vm229, %v208, 0
        %v341 = vsel %vm229, %v209, 0
        %343 = vmatprep.subr.mxu0 0.0
        %344 = vmatpush1.msra.mxu0 0.0
        %345 = vmatprep.subr.mxu0 0.0
        %346 = vmatpush1.msra.mxu0 0.0
        %347 = vmatprep.subr.mxu0 0.0
        %348 = vmatpush1.msra.mxu0 0.0
        %349 = vmatprep.subr.mxu0 0.0
        %350 = vmatpush1.msra.mxu0 0.0
        %351 = vmatprep.subr.mxu0 0.0
        %352 = vmatpush1.msra.mxu0 0.0
        %353 = vmatprep.subr.mxu0 0.0
        %354 = vmatpush1.msra.mxu0 0.0
        %355 = vmatprep.subr.mxu0 0.0
        %356 = vmatpush1.msra.mxu0 0.0
        %357 = vmatprep.subr.mxu0 0.0
        %358 = vmatpush1.msra.mxu0 0.0
        %359 = vmatprep.subr.mxu0 0.0
        %360 = vmatpush1.msra.mxu0 0.0
        %361 = vmatprep.subr.mxu0 0.0
        %362 = vmatpush1.msra.mxu0 0.0
        %363 = vmatprep.subr.mxu0 0.0
        %364 = vmatpush1.msra.mxu0 0.0
        %365 = vmatprep.subr.mxu0 0.0
        %366 = vmatpush1.msra.mxu0 0.0
        %367 = vmatprep.subr.mxu0 0.0
        %368 = vmatpush1.msra.mxu0 0.0
        %369 = vmatprep.subr.mxu0 0.0
        %370 = vmatpush1.msra.mxu0 0.0
        %371 = vmatprep.subr.mxu0 0.0
        %372 = vmatpush1.msra.mxu0 0.0
        %373 = vmatprep.subr.mxu0 %v171
        %374 = vmatpush1.msra.mxu0 %v170
        %375 = vmatprep.subr.mxu0 0.0
        %376 = vmatpush2.msra.mxu0 0.0
        %377 = vmatprep.subr.mxu0 0.0
        %378 = vmatpush2.msra.mxu0 0.0
        %379 = vmatprep.subr.mxu0 0.0
        %380 = vmatpush2.msra.mxu0 0.0
        %381 = vmatprep.subr.mxu0 0.0
        %382 = vmatpush2.msra.mxu0 0.0
        %383 = vmatprep.subr.mxu0 0.0
        %384 = vmatpush2.msra.mxu0 0.0
        %385 = vmatprep.subr.mxu0 0.0
        %386 = vmatpush2.msra.mxu0 0.0
        %387 = vmatprep.subr.mxu0 0.0
        %388 = vmatpush2.msra.mxu0 0.0
        %389 = vmatprep.subr.mxu0 0.0
        %390 = vmatpush2.msra.mxu0 0.0
        %391 = vmatprep.subr.mxu0 0.0
        %392 = vmatpush2.msra.mxu0 0.0
        %393 = vmatprep.subr.mxu0 0.0
        %394 = vmatpush2.msra.mxu0 0.0
        %395 = vmatprep.subr.mxu0 0.0
        %396 = vmatpush2.msra.mxu0 0.0
        %397 = vmatprep.subr.mxu0 0.0
        %398 = vmatpush2.msra.mxu0 0.0
        %399 = vmatprep.subr.mxu0 0.0
        %400 = vmatpush2.msra.mxu0 0.0
        %401 = vmatprep.subr.mxu0 0.0
        %402 = vmatpush2.msra.mxu0 0.0
        %403 = vmatprep.subr.mxu0 0.0
        %404 = vmatpush2.msra.mxu0 0.0
        %405 = vmatprep.subr.mxu0 0.0
        %406 = vmatpush2.msra.mxu0 0.0
        %407 = vmatprep.mubr.f32.mxu0 0.0
        %408 = vmatmul.mubr.f32.gmra.mxu0 %v332
        %v409 = vpop.f32.mrf.mxu0
        %v410 = vadd.f32 %v309, %v409
        %v411 = vpop.f32.mrf.mxu0
        %v412 = vadd.f32 %v311, %v411
        %413 = vmatprep.mubr.f32.mxu0 0.0
        %414 = vmatmul.mubr.f32.gmra.mxu0 %v335
        %v415 = vpop.f32.mrf.mxu0
        %v416 = vadd.f32 %v315, %v415
        %v417 = vpop.f32.mrf.mxu0
        %v418 = vadd.f32 %v317, %v417
        %419 = vmatprep.mubr.f32.mxu0 0.0
        %420 = vmatmul.mubr.f32.gmra.mxu0 %v338
        %v421 = vpop.f32.mrf.mxu0
        %v422 = vadd.f32 %v321, %v421
        %v423 = vpop.f32.mrf.mxu0
        %v424 = vadd.f32 %v323, %v423
        %425 = vmatprep.mubr.f32.mxu0 0.0
        %426 = vmatmul.mubr.f32.gmra.mxu0 %v341
        %v427 = vpop.f32.mrf.mxu0
        %v428 = vadd.f32 %v327, %v427
        %v429 = vpop.f32.mrf.mxu0
        %v430 = vadd.f32 %v329, %v429
        %431 = vdwg.mxu0
        %s432 = scalar_lea.vmem %s1, 64
        %v433 = vld [vmem:[%s432] sm:$0xff]
        %v434 = vld [vmem:[%s432 + $0x8] sm:$0xff]
        %v435 = vld [vmem:[%s432 + $0x10] sm:$0xff]
        %v436 = vld [vmem:[%s432 + $0x18] sm:$0xff]
        %440 = vrot.lane.b32.xlu0 %v170, 112
        %v441 = vpop.permute.xlu0 %440
        %442 = vrot.lane.b32.xlu0 %v171, 112
        %v443 = vpop.permute.xlu0 %442
        %444 = vrot.lane.b32.xlu0 %v172, 112
        %v445 = vpop.permute.xlu0 %444
        %vm446 = vcmask 916480
        %v447 = vsel %vm446, %v441, %v443
        %v448 = vsel %vm446, %v443, %v445
        %v452 = vsel %vm229, %v433, 0
        %v455 = vsel %vm229, %v434, 0
        %v458 = vsel %vm229, %v435, 0
        %v461 = vsel %vm229, %v436, 0
        %463 = vmatprep.subr.mxu0 0.0
        %464 = vmatpush1.msra.mxu0 0.0
        %465 = vmatprep.subr.mxu0 0.0
        %466 = vmatpush1.msra.mxu0 0.0
        %467 = vmatprep.subr.mxu0 0.0
        %468 = vmatpush1.msra.mxu0 0.0
        %469 = vmatprep.subr.mxu0 0.0
        %470 = vmatpush1.msra.mxu0 0.0
        %471 = vmatprep.subr.mxu0 0.0
        %472 = vmatpush1.msra.mxu0 0.0
        %473 = vmatprep.subr.mxu0 0.0
        %474 = vmatpush1.msra.mxu0 0.0
        %475 = vmatprep.subr.mxu0 0.0
        %476 = vmatpush1.msra.mxu0 0.0
        %477 = vmatprep.subr.mxu0 0.0
        %478 = vmatpush1.msra.mxu0 0.0
        %479 = vmatprep.subr.mxu0 0.0
        %480 = vmatpush1.msra.mxu0 0.0
        %481 = vmatprep.subr.mxu0 0.0
        %482 = vmatpush1.msra.mxu0 0.0
        %483 = vmatprep.subr.mxu0 0.0
        %484 = vmatpush1.msra.mxu0 0.0
        %485 = vmatprep.subr.mxu0 0.0
        %486 = vmatpush1.msra.mxu0 0.0
        %487 = vmatprep.subr.mxu0 0.0
        %488 = vmatpush1.msra.mxu0 0.0
        %489 = vmatprep.subr.mxu0 0.0
        %490 = vmatpush1.msra.mxu0 0.0
        %491 = vmatprep.subr.mxu0 0.0
        %492 = vmatpush1.msra.mxu0 0.0
        %493 = vmatprep.subr.mxu0 %v448
        %494 = vmatpush1.msra.mxu0 %v447
        %495 = vmatprep.subr.mxu0 0.0
        %496 = vmatpush2.msra.mxu0 0.0
        %497 = vmatprep.subr.mxu0 0.0
        %498 = vmatpush2.msra.mxu0 0.0
        %499 = vmatprep.subr.mxu0 0.0
        %500 = vmatpush2.msra.mxu0 0.0
        %501 = vmatprep.subr.mxu0 0.0
        %502 = vmatpush2.msra.mxu0 0.0
        %503 = vmatprep.subr.mxu0 0.0
        %504 = vmatpush2.msra.mxu0 0.0
        %505 = vmatprep.subr.mxu0 0.0
        %506 = vmatpush2.msra.mxu0 0.0
        %507 = vmatprep.subr.mxu0 0.0
        %508 = vmatpush2.msra.mxu0 0.0
        %509 = vmatprep.subr.mxu0 0.0
        %510 = vmatpush2.msra.mxu0 0.0
        %511 = vmatprep.subr.mxu0 0.0
        %512 = vmatpush2.msra.mxu0 0.0
        %513 = vmatprep.subr.mxu0 0.0
        %514 = vmatpush2.msra.mxu0 0.0
        %515 = vmatprep.subr.mxu0 0.0
        %516 = vmatpush2.msra.mxu0 0.0
        %517 = vmatprep.subr.mxu0 0.0
        %518 = vmatpush2.msra.mxu0 0.0
        %519 = vmatprep.subr.mxu0 0.0
        %520 = vmatpush2.msra.mxu0 0.0
        %521 = vmatprep.subr.mxu0 0.0
        %522 = vmatpush2.msra.mxu0 0.0
        %523 = vmatprep.subr.mxu0 0.0
        %524 = vmatpush2.msra.mxu0 0.0
        %525 = vmatprep.subr.mxu0 0.0
        %526 = vmatpush2.msra.mxu0 0.0
        %527 = vmatprep.mubr.f32.mxu0 0.0
        %528 = vmatmul.mubr.f32.gmra.mxu0 %v452
        %v529 = vpop.f32.mrf.mxu0
        %v530 = vadd.f32 0.0, %v529
        %v531 = vpop.f32.mrf.mxu0
        %v532 = vadd.f32 0.0, %v531
        %533 = vmatprep.mubr.f32.mxu0 0.0
        %534 = vmatmul.mubr.f32.gmra.mxu0 %v455
        %v535 = vpop.f32.mrf.mxu0
        %v536 = vadd.f32 0.0, %v535
        %v537 = vpop.f32.mrf.mxu0
        %v538 = vadd.f32 0.0, %v537
        %539 = vmatprep.mubr.f32.mxu0 0.0
        %540 = vmatmul.mubr.f32.gmra.mxu0 %v458
        %v541 = vpop.f32.mrf.mxu0
        %v542 = vadd.f32 0.0, %v541
        %v543 = vpop.f32.mrf.mxu0
        %v544 = vadd.f32 0.0, %v543
        %545 = vmatprep.mubr.f32.mxu0 0.0
        %546 = vmatmul.mubr.f32.gmra.mxu0 %v461
        %v547 = vpop.f32.mrf.mxu0
        %v548 = vadd.f32 0.0, %v547
        %v549 = vpop.f32.mrf.mxu0
        %v550 = vadd.f32 0.0, %v549
        %551 = vdwg.mxu0
        %v552 = vadd.f32 %v410, %v530
        %v553 = vadd.f32 %v412, %v532
        %v554 = vadd.f32 %v416, %v536
        %v555 = vadd.f32 %v418, %v538
        %v556 = vadd.f32 %v422, %v542
        %v557 = vadd.f32 %v424, %v544
        %v558 = vadd.f32 %v428, %v548
        %v559 = vadd.f32 %v430, %v550
        %s560 = scalar_lea.vmem %s1, 96
        %v561 = vld [vmem:[%s560] sm:$0xff]
        %v562 = vld [vmem:[%s560 + $0x8] sm:$0xff]
        %v563 = vld [vmem:[%s560 + $0x10] sm:$0xff]
        %v564 = vld [vmem:[%s560 + $0x18] sm:$0xff]
        %568 = vrot.lane.b32.xlu0 %v203, 111
        %v569 = vpop.permute.xlu0 %568
        %570 = vrot.lane.b32.xlu0 %v204, 111
        %v571 = vpop.permute.xlu0 %570
        %572 = vrot.lane.b32.xlu0 %v205, 111
        %v573 = vpop.permute.xlu0 %572
        %vm574 = vcmask 908288
        %v575 = vsel %vm574, %v569, %v571
        %v576 = vsel %vm574, %v571, %v573
        %v580 = vsel %vm229, %v561, 0
        %v583 = vsel %vm229, %v562, 0
        %v586 = vsel %vm229, %v563, 0
        %v589 = vsel %vm229, %v564, 0
        %591 = vmatprep.subr.mxu0 0.0
        %592 = vmatpush1.msra.mxu0 0.0
        %593 = vmatprep.subr.mxu0 0.0
        %594 = vmatpush1.msra.mxu0 0.0
        %595 = vmatprep.subr.mxu0 0.0
        %596 = vmatpush1.msra.mxu0 0.0
        %597 = vmatprep.subr.mxu0 0.0
        %598 = vmatpush1.msra.mxu0 0.0
        %599 = vmatprep.subr.mxu0 0.0
        %600 = vmatpush1.msra.mxu0 0.0
        %601 = vmatprep.subr.mxu0 0.0
        %602 = vmatpush1.msra.mxu0 0.0
        %603 = vmatprep.subr.mxu0 0.0
        %604 = vmatpush1.msra.mxu0 0.0
        %605 = vmatprep.subr.mxu0 0.0
        %606 = vmatpush1.msra.mxu0 0.0
        %607 = vmatprep.subr.mxu0 0.0
        %608 = vmatpush1.msra.mxu0 0.0
        %609 = vmatprep.subr.mxu0 0.0
        %610 = vmatpush1.msra.mxu0 0.0
        %611 = vmatprep.subr.mxu0 0.0
        %612 = vmatpush1.msra.mxu0 0.0
        %613 = vmatprep.subr.mxu0 0.0
        %614 = vmatpush1.msra.mxu0 0.0
        %615 = vmatprep.subr.mxu0 0.0
        %616 = vmatpush1.msra.mxu0 0.0
        %617 = vmatprep.subr.mxu0 0.0
        %618 = vmatpush1.msra.mxu0 0.0
        %619 = vmatprep.subr.mxu0 0.0
        %620 = vmatpush1.msra.mxu0 0.0
        %621 = vmatprep.subr.mxu0 %v576
        %622 = vmatpush1.msra.mxu0 %v575
        %623 = vmatprep.subr.mxu0 0.0
        %624 = vmatpush2.msra.mxu0 0.0
        %625 = vmatprep.subr.mxu0 0.0
        %626 = vmatpush2.msra.mxu0 0.0
        %627 = vmatprep.subr.mxu0 0.0
        %628 = vmatpush2.msra.mxu0 0.0
        %629 = vmatprep.subr.mxu0 0.0
        %630 = vmatpush2.msra.mxu0 0.0
        %631 = vmatprep.subr.mxu0 0.0
        %632 = vmatpush2.msra.mxu0 0.0
        %633 = vmatprep.subr.mxu0 0.0
        %634 = vmatpush2.msra.mxu0 0.0
        %635 = vmatprep.subr.mxu0 0.0
        %636 = vmatpush2.msra.mxu0 0.0
        %637 = vmatprep.subr.mxu0 0.0
        %638 = vmatpush2.msra.mxu0 0.0
        %639 = vmatprep.subr.mxu0 0.0
        %640 = vmatpush2.msra.mxu0 0.0
        %641 = vmatprep.subr.mxu0 0.0
        %642 = vmatpush2.msra.mxu0 0.0
        %643 = vmatprep.subr.mxu0 0.0
        %644 = vmatpush2.msra.mxu0 0.0
        %645 = vmatprep.subr.mxu0 0.0
        %646 = vmatpush2.msra.mxu0 0.0
        %647 = vmatprep.subr.mxu0 0.0
        %648 = vmatpush2.msra.mxu0 0.0
        %649 = vmatprep.subr.mxu0 0.0
        %650 = vmatpush2.msra.mxu0 0.0
        %651 = vmatprep.subr.mxu0 0.0
        %652 = vmatpush2.msra.mxu0 0.0
        %653 = vmatprep.subr.mxu0 0.0
        %654 = vmatpush2.msra.mxu0 0.0
        %655 = vmatprep.mubr.f32.mxu0 0.0
        %656 = vmatmul.mubr.f32.gmra.mxu0 %v580
        %v657 = vpop.f32.mrf.mxu0
        %v658 = vadd.f32 0.0, %v657
        %v659 = vpop.f32.mrf.mxu0
        %v660 = vadd.f32 0.0, %v659
        %661 = vmatprep.mubr.f32.mxu0 0.0
        %662 = vmatmul.mubr.f32.gmra.mxu0 %v583
        %v663 = vpop.f32.mrf.mxu0
        %v664 = vadd.f32 0.0, %v663
        %v665 = vpop.f32.mrf.mxu0
        %v666 = vadd.f32 0.0, %v665
        %667 = vmatprep.mubr.f32.mxu0 0.0
        %668 = vmatmul.mubr.f32.gmra.mxu0 %v586
        %v669 = vpop.f32.mrf.mxu0
        %v670 = vadd.f32 0.0, %v669
        %v671 = vpop.f32.mrf.mxu0
        %v672 = vadd.f32 0.0, %v671
        %673 = vmatprep.mubr.f32.mxu0 0.0
        %674 = vmatmul.mubr.f32.gmra.mxu0 %v589
        %v675 = vpop.f32.mrf.mxu0
        %v676 = vadd.f32 0.0, %v675
        %v677 = vpop.f32.mrf.mxu0
        %v678 = vadd.f32 0.0, %v677
        %679 = vdwg.mxu0
        %v680 = vadd.f32 %v552, %v658
        %v681 = vadd.f32 %v553, %v660
        %v682 = vadd.f32 %v554, %v664
        %v683 = vadd.f32 %v555, %v666
        %v684 = vadd.f32 %v556, %v670
        %v685 = vadd.f32 %v557, %v672
        %v686 = vadd.f32 %v558, %v676
        %v687 = vadd.f32 %v559, %v678
        %v688 = vadd.f32 %v680, %v681
        %689 = vadd.xlane.f32.xlu0 %v688
        %v690 = vpop.xlane.xlu0 %689
        %v691 = vadd.f32 %v682, %v683
        %692 = vadd.xlane.f32.xlu0 %v691
        %v693 = vpop.xlane.xlu0 %692
        %v694 = vadd.f32 %v684, %v685
        %695 = vadd.xlane.f32.xlu0 %v694
        %v696 = vpop.xlane.xlu0 %695
        %v697 = vadd.f32 %v686, %v687
        %698 = vadd.xlane.f32.xlu0 %v697
        %v699 = vpop.xlane.xlu0 %698
        %v700 = vadd.f32 %v690, %v693
        %v701 = vadd.f32 %v700, %v696
        %v702 = vadd.f32 %v701, %v699
        %v703 = vmul.f32 %v702, 0.0009765625
        %v704 = vsub.f32 %v680, %v703
        %v705 = vsub.f32 %v681, %v703
        %v706 = vsub.f32 %v682, %v703
        %v707 = vsub.f32 %v683, %v703
        %v708 = vsub.f32 %v684, %v703
        %v709 = vsub.f32 %v685, %v703
        %v710 = vsub.f32 %v686, %v703
        %v711 = vsub.f32 %v687, %v703
        %v712 = vmul.f32 %v704, %v704
        %v713 = vmul.f32 %v705, %v705
        %v714 = vadd.f32 %v712, %v713
        %715 = vadd.xlane.f32.xlu0 %v714
        %v716 = vpop.xlane.xlu0 %715
        %v717 = vmul.f32 %v706, %v706
        %v718 = vmul.f32 %v707, %v707
        %v719 = vadd.f32 %v717, %v718
        %720 = vadd.xlane.f32.xlu0 %v719
        %v721 = vpop.xlane.xlu0 %720
        %v722 = vadd.f32 %v716, %v721
        %v723 = vmul.f32 %v708, %v708
        %v724 = vmul.f32 %v709, %v709
        %v725 = vadd.f32 %v723, %v724
        %726 = vadd.xlane.f32.xlu0 %v725
        %v727 = vpop.xlane.xlu0 %726
        %v728 = vadd.f32 %v722, %v727
        %v729 = vmul.f32 %v710, %v710
        %v730 = vmul.f32 %v711, %v711
        %v731 = vadd.f32 %v729, %v730
        %732 = vadd.xlane.f32.xlu0 %v731
        %v733 = vpop.xlane.xlu0 %732
        %v734 = vadd.f32 %v728, %v733
        %v735 = vmul.f32 %v734, 0.0009765625
        %v736 = vadd.f32 %v735, 1e-05
        %v737 = vrsqrt.pop %v736
        %v738 = vmul.f32 %v704, %v737
        %v739 = vmul.f32 %v705, %v737
        %v740 = vmax.f32 %v738, 0.0
        %v741 = vmax.f32 %v739, 0.0
        %742 = vst [vmem:[%s163] sm:$0xff] %v740
        %743 = vst [vmem:[%s163 + $0x8] sm:$0xff] %v741
        %v744 = vmul.f32 %v706, %v737
        %v745 = vmul.f32 %v707, %v737
        %v746 = vmax.f32 %v744, 0.0
        %v747 = vmax.f32 %v745, 0.0
        %748 = vst [vmem:[%s163 + $0x10] sm:$0xff] %v746
        %749 = vst [vmem:[%s163 + $0x18] sm:$0xff] %v747
        %v750 = vmul.f32 %v708, %v737
        %v751 = vmul.f32 %v709, %v737
        %v752 = vmax.f32 %v750, 0.0
        %v753 = vmax.f32 %v751, 0.0
        %754 = vst [vmem:[%s163 + $0x20] sm:$0xff] %v752
        %755 = vst [vmem:[%s163 + $0x28] sm:$0xff] %v753
        %v756 = vmul.f32 %v710, %v737
        %v757 = vmul.f32 %v711, %v737
        %v758 = vmax.f32 %v756, 0.0
        %v759 = vmax.f32 %v757, 0.0
        %760 = vst [vmem:[%s163 + $0x30] sm:$0xff] %v758
        %761 = vst [vmem:[%s163 + $0x38] sm:$0xff] %v759
        %s762 = sand.u32 %s93, 1
        %s763 = scalar_lea.sflag [#allocation3], %s762
        %s764 = sand.u32 %s93, 1
        %s765 = smul.addr %s764, 64
        %s766 = scalar_lea.vmem [#allocation2], %s765
        // Predicated region
        $region33: #{tpu_custom_call.1} parent=31 // pred_check
          %p767 = pneg %p103
        $region34: #{tpu_custom_call.1} parent=31 // pred_check_branch
          %769 = sbr.rel (%p767) target = $region36
        $region35: #{tpu_custom_call.1} parent=31 // pred_region
          %s771 = ssub.s32 1024, 1024
          %772 = vsyncadd %s763, %s771
          %s773 = smul.addr %s17, 8
          %s774 = smul.addr %s773, 128
          %s775 = scalar_lea.hbm %s3, %s774
          %s776 = sshll.u32 %s766, 4
          %s777 = int_to_ptr.vmem [resolvable:$true] %s776
          %782 = dma.vmem_to_hbm [thread:$0]  %s777, 1024, %s775, %s763, 256, 256, 16
        $region36: #{tpu_custom_call.1} parent=31 // pred_fallthru
          _
      $region32: #{tpu_custom_call.1} parent=5 // pred_fallthru
        _
      %p783 = scmp.le.s32.totalorder 2, %s12
      // Predicated region
      $region37: #{tpu_custom_call.1} parent=5 // pred_check
        %p784 = pneg %p783
      $region38: #{tpu_custom_call.1} parent=5 // pred_check_branch
        %786 = sbr.rel (%p784) target = $region40
      $region39: #{tpu_custom_call.1} parent=5 // pred_region
        %s787 = ssub.s32 %s12, 2
        // Predicated region
        $region41: #{tpu_custom_call.1} parent=39 // pred_check
          %p788 = pneg %p109
        $region42: #{tpu_custom_call.1} parent=39 // pred_check_branch
          %790 = sbr.rel (%p788) target = $region44
        $region43: #{tpu_custom_call.1} parent=39 // pred_region
          %s791 = sand.u32 %s94, 1
          %s792 = scalar_lea.sflag [#allocation3], %s791
          %s793 = sand.u32 %s94, 1
          %s794 = smul.addr %s793, 64
          %s795 = scalar_lea.vmem [#allocation2], %s794
          %796 = dma.done %s792, 1024
        $region44: #{tpu_custom_call.1} parent=39 // pred_fallthru
          _
      $region40: #{tpu_custom_call.1} parent=5 // pred_fallthru
        _
    $region6: #{tpu_custom_call.1} parent=1 // loop_footer
      %s16 = sadd.s32 1, %s12
    $region7: #{tpu_custom_call.1} parent=1 // loop_footer_branch
      %11 = sbr.rel target = $region3
    $region8: #{tpu_custom_call.1} parent=1 // loop_exit
      _
    %797 = vsyncpa [#allocation3], 1
    %s798 = scalar_lea.sflag [#allocation3], 1
    %799 = vsyncpa %s798, 1

</llo_original>
